<compile_context>
chip_gen: v7x
topology: tpu7x:2x2x1
jax: 0.10.0
libtpu: 0.0.40
codegen_flags: <defaults>
</compile_context>

<pallas_src>
import functools
import numpy as np
import jax
import jax.numpy as jnp
from jax.experimental import pallas as pl
from jax.experimental.pallas import tpu as pltpu

NKS_ALPHA = 0.6
CONF_THRESH = 0.05
NMS_THRESH = 0.5
TOPK = 100


# ----------------------------- Pallas kernel --------------------------------
def _detector_kernel(num_cls, feat_ref, w_ref, b_ref, pixloc_ref,
                     cls_ref, loc_ref):
    # feat_ref:   (1, K, HW)        f32 patch features for one image
    # w_ref:      (Ctot_pad, K)     f32 head weights (rows >= num_cls+5 are 0)
    # b_ref:      (Ctot_pad, 1)     f32 head bias
    # pixloc_ref: (4, HW)           f32 anchor pixel locations
    # cls_ref:    (1, num_cls, HW)  f32 peak-suppressed class scores
    # loc_ref:    (1, 4, HW)        f32 decoded boxes
    feat = feat_ref[0]                                            # (K, HW)
    pred = jnp.dot(w_ref[...], feat,
                   preferred_element_type=jnp.float32) + b_ref[...]

    cls_logits = pred[:num_cls, :]                    # (num_cls, HW)
    loc_raw = pred[num_cls:num_cls + 4, :]            # (4, HW)
    nks_logit = pred[num_cls + 4:num_cls + 5, :]      # (1, HW)

    # loc_pred = relu(loc_raw) * [-1,-1,1,1]^T + pixel_location
    loc_row = jax.lax.broadcasted_iota(jnp.int32, (4, 1), 0)
    loc_w = jnp.where(loc_row < 2, -1.0, 1.0)         # (4, 1)
    loc_pred = jnp.maximum(loc_raw, 0.0) * loc_w + pixloc_ref[...]

    # nks re-weighting of the class scores.
    nks = jax.nn.sigmoid(nks_logit)
    nks = jax.nn.sigmoid(2.0 * nks - 1.0)             # == 1/(1+exp(-2*nks+1))
    exponent = (2.0 - nks) * NKS_ALPHA + 1e-14
    # sigmoid(x) ** e computed from the logits: log(sigmoid(x)) = -softplus(-x)
    log_p = -jax.nn.softplus(-cls_logits)
    cls_pred = jnp.exp(exponent * log_p)              # (num_cls, HW), f32

    # 3x3 / stride-1 / pad-1 max pool over the flat (HW, num_cls) plane for
    # this image, -inf padding.  Lane axis = flat anchors, sublanes = classes.
    neg_inf = jnp.float32(-jnp.inf)
    hw = cls_pred.shape[1]
    lane = jax.lax.broadcasted_iota(jnp.int32, (1, hw), 1)        # (1, HW)
    left = jnp.where(lane == 0, neg_inf, pltpu.roll(cls_pred, 1, axis=1))
    right = jnp.where(lane == hw - 1, neg_inf,
                      pltpu.roll(cls_pred, hw - 1, axis=1))
    hmax = jnp.maximum(jnp.maximum(left, cls_pred), right)

    row = jax.lax.broadcasted_iota(jnp.int32, (num_cls, 1), 0)    # (num_cls,1)
    up = jnp.where(row == 0, neg_inf, pltpu.roll(hmax, 1, axis=0))
    down = jnp.where(row == num_cls - 1, neg_inf,
                     pltpu.roll(hmax, num_cls - 1, axis=0))
    hmax = jnp.maximum(jnp.maximum(up, hmax), down)

    # keep only local peaks (exact-equality tie keeping, like the reference)
    cls_ref[0] = jnp.where(hmax == cls_pred, cls_pred, 0.0)
    loc_ref[0] = loc_pred


@functools.partial(jax.jit, static_argnums=(4, 5))
def detector_pallas(x, w, b, pixel_location, num_cls, stride):
    """x: NCHW image.  Returns kernel-native
       cls (B, num_cls, HW)  and  loc (B, 4, HW)."""
    B, Cin, H, W = x.shape
    hs, ws = H // stride, W // stride
    HW = hs * ws
    K = Cin * stride * stride
    Ctot = num_cls + 5
    Ctot_pad = ((Ctot + 7) // 8) * 8   # sublane-aligned pred slab

    # glue: stride-s space-to-depth into (B, K, HW) feature slabs (one XLA
    # transpose pass, f32).  See TODO(synk) above about fusing this at prod.
    feat = x.astype(jnp.float32).reshape(B, Cin, hs, stride, ws, stride)
    feat = feat.transpose(0, 1, 3, 5, 2, 4).reshape(B, K, HW)     # (B, K, HW)

    w_t = jnp.zeros((Ctot_pad, K), jnp.float32).at[:Ctot].set(
        w.T.astype(jnp.float32))                                   # (Ctot_pad, K)
    b_col = jnp.zeros((Ctot_pad, 1), jnp.float32).at[:Ctot].set(
        b.reshape(Ctot, 1).astype(jnp.float32))                    # (Ctot_pad, 1)
    pixloc_t = pixel_location.T.astype(jnp.float32)                # (4, HW)

    kernel = functools.partial(_detector_kernel, num_cls)
    cls_out, loc_out = pl.pallas_call(
        kernel,
        out_shape=(jax.ShapeDtypeStruct((B, num_cls, HW), jnp.float32),
                   jax.ShapeDtypeStruct((B, 4, HW), jnp.float32)),
        grid=(B,),
        in_specs=[
            pl.BlockSpec((1, K, HW), lambda i: (i, 0, 0)),
            pl.BlockSpec((Ctot_pad, K), lambda i: (0, 0)),
            pl.BlockSpec((Ctot_pad, 1), lambda i: (0, 0)),
            pl.BlockSpec((4, HW), lambda i: (0, 0)),     # revisited -> resident
        ],
        out_specs=(pl.BlockSpec((1, num_cls, HW), lambda i: (i, 0, 0)),
                   pl.BlockSpec((1, 4, HW), lambda i: (i, 0, 0))),
        compiler_params=pltpu.CompilerParams(
            dimension_semantics=("parallel",),
            vmem_limit_bytes=32 * 1024 * 1024),
    )(feat, w_t, b_col, pixloc_t)
    return cls_out, loc_out


# --------------------------- host-side glue ----------------------------------
def set_init(input_size, strides):
    total = sum((input_size[0] // s) * (input_size[1] // s) for s in strides)
    pix = np.zeros((total, 4), dtype=np.float32)
    start = 0
    for s in strides:
        ws = input_size[1] // s
        hs = input_size[0] // s
        for ys in range(hs):
            for xs in range(ws):
                idx = start + ys * ws + xs
                xc = xs * s + s / 2.0
                yc = ys * s + s / 2.0
                pix[idx] = [xc, yc, xc, yc]
        start += ws * hs
    return pix


def _topk(scores_cm, hw, topk):
    # scores_cm: (num_cls, HW) kernel-native slab.  Its row-major flatten is
    # exactly torch's scores.permute(1,0).contiguous().view(-1) class-major
    # order, so no host-side transpose is needed.
    flat = scores_cm.reshape(-1)
    k = min(topk, flat.size)
    inds = np.argpartition(-flat, k - 1)[:k]
    inds = inds[np.argsort(-flat[inds], kind="stable")]
    topk_scores = flat[inds]
    topk_clses = (inds // hw).astype(np.int32)
    topk_inds = inds % hw
    return topk_scores, topk_inds, topk_clses


def nms(dets, scores, thresh):
    x1, y1, x2, y2 = dets[:, 0], dets[:, 1], dets[:, 2], dets[:, 3]
    areas = (x2 - x1) * (y2 - y1)
    order = scores.argsort()[::-1]
    keep = []
    while order.size > 0:
        i = order[0]
        keep.append(i)
        xx1 = np.maximum(x1[i], x1[order[1:]])
        yy1 = np.maximum(y1[i], y1[order[1:]])
        xx2 = np.minimum(x2[i], x2[order[1:]])
        yy2 = np.minimum(y2[i], y2[order[1:]])
        w = np.maximum(1e-28, xx2 - xx1)
        h = np.maximum(1e-28, yy2 - yy1)
        inter = w * h
        ovr = inter / (areas[i] + areas[order[1:]] - inter)
        inds = np.where(ovr <= thresh)[0]
        order = order[inds + 1]
    return keep


def evaluating_host(cls_np, loc_np, num_cls, input_size):
    # cls_np: (B, num_cls, HW), loc_np: (B, 4, HW) -- kernel-native layout.
    scale = np.array([[input_size[1], input_size[0],
                       input_size[1], input_size[0]]], dtype=np.float32)
    bbox_list, score_list, cls_list = [], [], []
    B = cls_np.shape[0]
    hw = cls_np.shape[2]
    for i in range(B):
        topk_scores, topk_inds, topk_clses = _topk(cls_np[i], hw, TOPK)
        keep = topk_scores > CONF_THRESH
        topk_scores = topk_scores[keep]
        topk_cls = topk_clses[keep]
        topk_bbox = loc_np[i][:, topk_inds[keep]].T        # (k, 4)
        # per-class NMS
        keep_mask = np.zeros(len(topk_bbox), dtype=np.int64)
        for c in range(num_cls):
            cinds = np.where(topk_cls == c)[0]
            if len(cinds) == 0:
                continue
            c_keep = nms(topk_bbox[cinds], topk_scores[cinds], NMS_THRESH)
            keep_mask[cinds[c_keep]] = 1
        sel = np.where(keep_mask > 0)
        topk_bbox = topk_bbox[sel]
        topk_scores = topk_scores[sel]
        topk_cls = topk_cls[sel]
        bboxes = np.clip(topk_bbox / scale, 0.0, 1.0)
        bbox_list.append(bboxes)
        score_list.append(topk_scores)
        cls_list.append(topk_cls)
    return bbox_list, score_list, cls_list


# --------------------------------- main ---------------------------------------
if __name__ == "__main__":
    input_size = (32, 32)        # (H, W)
    strides = [4]                # boost=True -> single stride
    num_cls = 8
    B, Cin = 2, 4
    stride = strides[0]
    K = Cin * stride * stride
    Ctot = num_cls + 5

    key = jax.random.PRNGKey(0)
    kx, kw, kb = jax.random.split(key, 3)
    x = jax.random.normal(kx, (B, Cin, input_size[0], input_size[1]),
                          dtype=jnp.float32)
    w = 0.1 * jax.random.normal(kw, (K, Ctot), dtype=jnp.float32)
    b = 0.01 * jax.random.normal(kb, (1, Ctot), dtype=jnp.float32)
    pixel_location = jnp.asarray(set_init(input_size, strides))

    cls_out, loc_out = detector_pallas(x, w, b, pixel_location, num_cls, stride)
    cls_out = jax.block_until_ready(cls_out)
    loc_out = jax.block_until_ready(loc_out)

    bbox_list, score_list, cls_list = evaluating_host(
        np.asarray(cls_out), np.asarray(loc_out), num_cls, input_size)

    assert cls_out.shape == (B, num_cls,
                             (input_size[0] // stride) * (input_size[1] // stride))
    assert loc_out.shape == (B, 4, cls_out.shape[2])
    assert len(bbox_list) == B and len(score_list) == B and len(cls_list) == B
    for bb in bbox_list:
        assert bb.ndim == 2 and bb.shape[1] == 4
        assert bb.size == 0 or (np.all(bb >= 0.0) and np.all(bb <= 1.0))

    print("KERNEL_OK")
</pallas_src>

<mosaic_0001>
module attributes {stable_mosaic.version = 11 : i64} {
  func.func @_detector_kernel(%arg0: i32, %arg1: memref<1x64x64xf32, #tpu.memory_space<vmem>>, %arg2: memref<16x64xf32, #tpu.memory_space<vmem>>, %arg3: memref<16x1xf32, #tpu.memory_space<vmem>>, %arg4: memref<4x64xf32, #tpu.memory_space<vmem>>, %arg5: memref<1x8x64xf32, #tpu.memory_space<vmem>>, %arg6: memref<1x4x64xf32, #tpu.memory_space<vmem>>) attributes {dimension_semantics = [#tpu.dimension_semantics<parallel>], iteration_bounds = array<i64: 2>, scalar_prefetch = 0 : i64, scratch_operands = 0 : i64, tpu.core_type = #tpu.core_type<tc>, window_params = [{transform_indices = @transform_0, window_bounds = array<i64: 1, 64, 64>}, {pipeline_mode = #tpu.pipeline_mode<synchronous>, transform_indices = @transform_1, window_bounds = array<i64: 16, 64>}, {pipeline_mode = #tpu.pipeline_mode<synchronous>, transform_indices = @transform_2, window_bounds = array<i64: 16, 1>}, {pipeline_mode = #tpu.pipeline_mode<synchronous>, transform_indices = @transform_3, window_bounds = array<i64: 4, 64>}, {transform_indices = @transform_4, window_bounds = array<i64: 1, 8, 64>}, {transform_indices = @transform_5, window_bounds = array<i64: 1, 4, 64>}]} {
    %c0 = arith.constant 0 : index
    %c0_0 = arith.constant 0 : index
    %c0_1 = arith.constant 0 : index
    %0 = vector.load %arg1[%c0, %c0_0, %c0_1] : memref<1x64x64xf32, #tpu.memory_space<vmem>>, vector<1x64x64xf32>
    %1 = vector.shape_cast %0 : vector<1x64x64xf32> to vector<64x64xf32>
    %c0_2 = arith.constant 0 : index
    %c0_3 = arith.constant 0 : index
    %2 = vector.load %arg2[%c0_2, %c0_3] : memref<16x64xf32, #tpu.memory_space<vmem>>, vector<16x64xf32>
    %cst = arith.constant dense<0.000000e+00> : vector<16x64xf32>
    %3 = tpu.matmul %2, %1, %cst {dimension_numbers = #tpu.dot_dimension_numbers<[1], [0], [0], [1], [0, 0, 1, 1], [], []>} : vector<16x64xf32>, vector<64x64xf32>, vector<16x64xf32> -> vector<16x64xf32>
    %c0_4 = arith.constant 0 : index
    %c0_5 = arith.constant 0 : index
    %4 = vector.load %arg3[%c0_4, %c0_5] : memref<16x1xf32, #tpu.memory_space<vmem>>, vector<16x1xf32>
    %5 = vector.broadcast %4 : vector<16x1xf32> to vector<16x64xf32>
    %6 = arith.addf %3, %5 : vector<16x64xf32>
    %7 = vector.extract_strided_slice %6 {offsets = [0, 0], sizes = [8, 64], strides = [1, 1]} : vector<16x64xf32> to vector<8x64xf32>
    %8 = vector.extract_strided_slice %6 {offsets = [8, 0], sizes = [4, 64], strides = [1, 1]} : vector<16x64xf32> to vector<4x64xf32>
    %9 = vector.extract_strided_slice %6 {offsets = [12, 0], sizes = [1, 64], strides = [1, 1]} : vector<16x64xf32> to vector<1x64xf32>
    %10 = tpu.iota {dimensions = array<i32: 0>} : vector<4x1xi32>
    %c2_i32 = arith.constant 2 : i32
    %11 = vector.broadcast %c2_i32 : i32 to vector<4x1xi32>
    %12 = arith.cmpi slt, %10, %11 : vector<4x1xi32>
    %cst_6 = arith.constant -1.000000e+00 : f32
    %cst_7 = arith.constant 1.000000e+00 : f32
    %13 = vector.broadcast %cst_6 : f32 to vector<4x1xf32>
    %14 = vector.broadcast %cst_7 : f32 to vector<4x1xf32>
    %15 = arith.select %12, %13, %14 : vector<4x1xi1>, vector<4x1xf32>
    %cst_8 = arith.constant 0.000000e+00 : f32
    %16 = vector.broadcast %cst_8 : f32 to vector<4x64xf32>
    %17 = arith.maximumf %8, %16 : vector<4x64xf32>
    %18 = vector.broadcast %15 : vector<4x1xf32> to vector<4x64xf32>
    %19 = arith.mulf %17, %18 : vector<4x64xf32>
    %c0_9 = arith.constant 0 : index
    %c0_10 = arith.constant 0 : index
    %20 = vector.load %arg4[%c0_9, %c0_10] : memref<4x64xf32, #tpu.memory_space<vmem>>, vector<4x64xf32>
    %21 = arith.addf %19, %20 : vector<4x64xf32>
    %22 = arith.negf %9 : vector<1x64xf32>
    %23 = math.exp %22 : vector<1x64xf32>
    %cst_11 = arith.constant 1.000000e+00 : f32
    %24 = vector.broadcast %cst_11 : f32 to vector<1x64xf32>
    %25 = arith.addf %24, %23 : vector<1x64xf32>
    %26 = arith.divf %24, %25 : vector<1x64xf32>
    %cst_12 = arith.constant 2.000000e+00 : f32
    %27 = vector.broadcast %cst_12 : f32 to vector<1x64xf32>
    %28 = arith.mulf %27, %26 : vector<1x64xf32>
    %cst_13 = arith.constant 1.000000e+00 : f32
    %29 = vector.broadcast %cst_13 : f32 to vector<1x64xf32>
    %30 = arith.subf %28, %29 : vector<1x64xf32>
    %31 = arith.negf %30 : vector<1x64xf32>
    %32 = math.exp %31 : vector<1x64xf32>
    %cst_14 = arith.constant 1.000000e+00 : f32
    %33 = vector.broadcast %cst_14 : f32 to vector<1x64xf32>
    %34 = arith.addf %33, %32 : vector<1x64xf32>
    %35 = arith.divf %33, %34 : vector<1x64xf32>
    %cst_15 = arith.constant 2.000000e+00 : f32
    %36 = vector.broadcast %cst_15 : f32 to vector<1x64xf32>
    %37 = arith.subf %36, %35 : vector<1x64xf32>
    %cst_16 = arith.constant 6.000000e-01 : f32
    %38 = vector.broadcast %cst_16 : f32 to vector<1x64xf32>
    %39 = arith.mulf %37, %38 : vector<1x64xf32>
    %cst_17 = arith.constant 9.99999982E-15 : f32
    %40 = vector.broadcast %cst_17 : f32 to vector<1x64xf32>
    %41 = arith.addf %39, %40 : vector<1x64xf32>
    %cst_18 = arith.constant 0.000000e+00 : f32
    %42 = vector.broadcast %cst_18 : f32 to vector<8x64xf32>
    %43 = arith.subf %42, %7 : vector<8x64xf32>
    %cst_19 = arith.constant 0.000000e+00 : f32
    %44 = vector.broadcast %cst_19 : f32 to vector<8x64xf32>
    %45 = arith.maximumf %43, %44 : vector<8x64xf32>
    %46 = vector.broadcast %cst_19 : f32 to vector<8x64xf32>
    %47 = arith.subf %43, %46 : vector<8x64xf32>
    %48 = arith.cmpf one, %47, %47 : vector<8x64xf32>
    %49 = vector.broadcast %cst_19 : f32 to vector<8x64xf32>
    %50 = arith.addf %43, %49 : vector<8x64xf32>
    %51 = math.absf %47 : vector<8x64xf32>
    %cst_20 = arith.constant 0.000000e+00 : f32
    %52 = vector.broadcast %cst_20 : f32 to vector<8x64xf32>
    %53 = arith.subf %52, %51 : vector<8x64xf32>
    %54 = math.exp %53 : vector<8x64xf32>
    %55 = math.log1p %54 : vector<8x64xf32>
    %56 = arith.addf %45, %55 : vector<8x64xf32>
    %57 = arith.select %48, %50, %56 : vector<8x64xi1>, vector<8x64xf32>
    %cst_21 = arith.constant 0.000000e+00 : f32
    %58 = vector.broadcast %cst_21 : f32 to vector<8x64xf32>
    %59 = arith.subf %58, %57 : vector<8x64xf32>
    %60 = vector.broadcast %41 : vector<1x64xf32> to vector<8x64xf32>
    %61 = arith.mulf %60, %59 : vector<8x64xf32>
    %62 = math.exp %61 : vector<8x64xf32>
    %63 = tpu.iota {dimensions = array<i32: 1>} : vector<1x64xi32>
    %c0_i32 = arith.constant 0 : i32
    %64 = vector.broadcast %c0_i32 : i32 to vector<1x64xi32>
    %65 = arith.cmpi eq, %63, %64 : vector<1x64xi32>
    %c1_i32 = arith.constant 1 : i32
    %66 = tpu.dynamic_rotate %62 by %c1_i32 dim 1 : vector<8x64xf32>, i32 -> vector<8x64xf32>
    %cst_22 = arith.constant 0xFF800000 : f32
    %67 = vector.shape_cast %65 : vector<1x64xi1> to vector<1x64xi1>
    %68 = vector.broadcast %67 : vector<1x64xi1> to vector<8x64xi1>
    %69 = vector.broadcast %cst_22 : f32 to vector<8x64xf32>
    %70 = arith.select %68, %69, %66 : vector<8x64xi1>, vector<8x64xf32>
    %c63_i32 = arith.constant 63 : i32
    %71 = vector.broadcast %c63_i32 : i32 to vector<1x64xi32>
    %72 = arith.cmpi eq, %63, %71 : vector<1x64xi32>
    %c63_i32_23 = arith.constant 63 : i32
    %73 = tpu.dynamic_rotate %62 by %c63_i32_23 dim 1 : vector<8x64xf32>, i32 -> vector<8x64xf32>
    %cst_24 = arith.constant 0xFF800000 : f32
    %74 = vector.shape_cast %72 : vector<1x64xi1> to vector<1x64xi1>
    %75 = vector.broadcast %74 : vector<1x64xi1> to vector<8x64xi1>
    %76 = vector.broadcast %cst_24 : f32 to vector<8x64xf32>
    %77 = arith.select %75, %76, %73 : vector<8x64xi1>, vector<8x64xf32>
    %78 = arith.maximumf %70, %62 : vector<8x64xf32>
    %79 = arith.maximumf %78, %77 : vector<8x64xf32>
    %80 = tpu.iota {dimensions = array<i32: 0>} : vector<8x1xi32>
    %c0_i32_25 = arith.constant 0 : i32
    %81 = vector.broadcast %c0_i32_25 : i32 to vector<8x1xi32>
    %82 = arith.cmpi eq, %80, %81 : vector<8x1xi32>
    %c1_i32_26 = arith.constant 1 : i32
    %83 = tpu.dynamic_rotate %79 by %c1_i32_26 dim 0 : vector<8x64xf32>, i32 -> vector<8x64xf32>
    %cst_27 = arith.constant 0xFF800000 : f32
    %84 = vector.shape_cast %82 : vector<8x1xi1> to vector<8x1xi1>
    %85 = vector.broadcast %84 : vector<8x1xi1> to vector<8x64xi1>
    %86 = vector.broadcast %cst_27 : f32 to vector<8x64xf32>
    %87 = arith.select %85, %86, %83 : vector<8x64xi1>, vector<8x64xf32>
    %c7_i32 = arith.constant 7 : i32
    %88 = vector.broadcast %c7_i32 : i32 to vector<8x1xi32>
    %89 = arith.cmpi eq, %80, %88 : vector<8x1xi32>
    %c7_i32_28 = arith.constant 7 : i32
    %90 = tpu.dynamic_rotate %79 by %c7_i32_28 dim 0 : vector<8x64xf32>, i32 -> vector<8x64xf32>
    %cst_29 = arith.constant 0xFF800000 : f32
    %91 = vector.shape_cast %89 : vector<8x1xi1> to vector<8x1xi1>
    %92 = vector.broadcast %91 : vector<8x1xi1> to vector<8x64xi1>
    %93 = vector.broadcast %cst_29 : f32 to vector<8x64xf32>
    %94 = arith.select %92, %93, %90 : vector<8x64xi1>, vector<8x64xf32>
    %95 = arith.maximumf %87, %79 : vector<8x64xf32>
    %96 = arith.maximumf %95, %94 : vector<8x64xf32>
    %97 = arith.cmpf oeq, %96, %62 : vector<8x64xf32>
    %cst_30 = arith.constant 0.000000e+00 : f32
    %98 = vector.broadcast %cst_30 : f32 to vector<8x64xf32>
    %99 = arith.select %97, %62, %98 : vector<8x64xi1>, vector<8x64xf32>
    %c0_31 = arith.constant 0 : index
    %c0_32 = arith.constant 0 : index
    %c0_33 = arith.constant 0 : index
    %100 = vector.load %arg5[%c0_31, %c0_32, %c0_33] : memref<1x8x64xf32, #tpu.memory_space<vmem>>, vector<1x8x64xf32>
    %101 = vector.shape_cast %100 : vector<1x8x64xf32> to vector<8x64xf32>
    %102 = vector.shape_cast %99 : vector<8x64xf32> to vector<1x8x64xf32>
    tpu.vector_store %arg5[%c0_31, %c0_32, %c0_33], %102 {strides = array<i32>} : memref<1x8x64xf32, #tpu.memory_space<vmem>>, vector<1x8x64xf32>,
    %c0_34 = arith.constant 0 : index
    %c0_35 = arith.constant 0 : index
    %c0_36 = arith.constant 0 : index
    %103 = vector.load %arg6[%c0_34, %c0_35, %c0_36] : memref<1x4x64xf32, #tpu.memory_space<vmem>>, vector<1x4x64xf32>
    %104 = vector.shape_cast %103 : vector<1x4x64xf32> to vector<4x64xf32>
    %105 = vector.shape_cast %21 : vector<4x64xf32> to vector<1x4x64xf32>
    tpu.vector_store %arg6[%c0_34, %c0_35, %c0_36], %105 {strides = array<i32>} : memref<1x4x64xf32, #tpu.memory_space<vmem>>, vector<1x4x64xf32>,
    return
  }
  func.func @transform_0(%arg0: i32) -> (i32, i32, i32) {
    %c0_i32 = arith.constant 0 : i32
    %c0_i32_0 = arith.constant 0 : i32
    %c0_i32_1 = arith.constant 0 : i32
    return %arg0, %c0_i32, %c0_i32_0 : i32, i32, i32
  }
  func.func @transform_1(%arg0: i32) -> (i32, i32) {
    %c0_i32 = arith.constant 0 : i32
    %c0_i32_0 = arith.constant 0 : i32
    %c0_i32_1 = arith.constant 0 : i32
    return %c0_i32, %c0_i32_0 : i32, i32
  }
  func.func @transform_2(%arg0: i32) -> (i32, i32) {
    %c0_i32 = arith.constant 0 : i32
    %c0_i32_0 = arith.constant 0 : i32
    %c0_i32_1 = arith.constant 0 : i32
    return %c0_i32, %c0_i32_0 : i32, i32
  }
  func.func @transform_3(%arg0: i32) -> (i32, i32) {
    %c0_i32 = arith.constant 0 : i32
    %c0_i32_0 = arith.constant 0 : i32
    %c0_i32_1 = arith.constant 0 : i32
    return %c0_i32, %c0_i32_0 : i32, i32
  }
  func.func @transform_4(%arg0: i32) -> (i32, i32, i32) {
    %c0_i32 = arith.constant 0 : i32
    %c0_i32_0 = arith.constant 0 : i32
    %c0_i32_1 = arith.constant 0 : i32
    return %arg0, %c0_i32, %c0_i32_0 : i32, i32, i32
  }
  func.func @transform_5(%arg0: i32) -> (i32, i32, i32) {
    %c0_i32 = arith.constant 0 : i32
    %c0_i32_0 = arith.constant 0 : i32
    %c0_i32_1 = arith.constant 0 : i32
    return %arg0, %c0_i32, %c0_i32_0 : i32, i32, i32
  }
}

</mosaic_0001>

<llo_original>
// kernel: detector_pallas.1
$region0: #{detector_pallas.1}
  #allocation0 [shape = 'u32[]', space=smem, size = 0x4, offset = 0x4, fixed_abs, tag = 'smem constant byte address 0x4 - core index']
  #allocation1 [shape = 'u32[144,128]{1,0:T(1,128)}', space=vmem, size = 0x12000, scoped, tag = 'internal scratch']
  %s0 = inlined_call_operand.vmem [shape: f32[2,64,64], index: 0, kind: input, shape index: {}]
  %s1 = inlined_call_operand.vmem [shape: f32[16,64], index: 1, kind: input, shape index: {}]
  %s2 = inlined_call_operand.vmem [shape: f32[16,1], index: 2, kind: input, shape index: {}]
  %s3 = inlined_call_operand.vmem [shape: f32[4,64], index: 3, kind: input, shape index: {}]
  %s4 = inlined_call_operand.hbm [shape: f32[2,8,64], index: 4, kind: output, shape index: {0}]
  %s5 = inlined_call_operand.hbm [shape: f32[2,4,64], index: 5, kind: output, shape index: {1}]
  %6 = xla_tuple %s4, %s5
  %s7 = sld [smem:[#allocation0]]
  $region57: #{detector_pallas.1} parent=0
    _
  %s9 = ssub.s32 1, %s7
  %s10 = scalar_select 0, %s9, %s7
  $region1: #{detector_pallas.1} parent=0
    #allocation2 [shape = 'u8[8192]{0}', space=vmem, size = 0x2000, scoped, tag = 'output window, operand 0']
    #allocation3 [shape = 's32[2]{0}', space=sflag, size = 0x8, scoped, tag = 'scoped memory for detector_pallas.1']
    #allocation4 [shape = 'u8[4096]{0}', space=vmem, size = 0x1000, scoped, tag = 'output window, operand 1']
    #allocation5 [shape = 's32[2]{0}', space=sflag, size = 0x8, scoped, tag = 'scoped memory for detector_pallas.1']
    %11 = vsyncpa [#allocation3], 0
    %s12 = scalar_lea.sflag [#allocation3], 1
    %13 = vsyncpa %s12, 0
    %14 = vsyncpa [#allocation5], 0
    %s15 = scalar_lea.sflag [#allocation5], 1
    %16 = vsyncpa %s15, 0
    loop: start=0, step=1, limit=4
    $region2: #{detector_pallas.1} parent=1 // loop_pre_header
      _
    $region3: #{detector_pallas.1} parent=1 // loop_header
      %s18 = sphi 0, %s22
      %p19 = scmp.ge.s32.totalorder %s18, 4
      %s28 = sphi 0, %s30
      %s31 = sphi 0, %s28
      %s32 = sphi 0, %s31
      %s48 = sphi 0, %s32
      %s52 = sphi 0, %s52
      %s54 = sphi 0, %s52
      %s55 = sphi 0, %s54
      %s69 = sphi 0, %s55
      %s73 = sphi 0, %s73
      %s75 = sphi 0, %s73
      %s76 = sphi 0, %s75
      %s90 = sphi 0, %s76
      %s94 = sphi 0, %s94
      %s96 = sphi 0, %s94
      %s97 = sphi 0, %s96
      %s111 = sphi 0, %s97
      %s117 = sphi 0, %s119
      %s120 = sphi 0, %s117
      %s121 = sphi 0, %s120
      %s137 = sphi 0, %s121
      %s143 = sphi 0, %s145
      %s146 = sphi 0, %s143
      %s147 = sphi 0, %s146
      %s163 = sphi 0, %s147
    $region4: #{detector_pallas.1} parent=1 // loop_header_branch
      %21 = sbr.rel (%p19) target = $region8
    $region5: #{detector_pallas.1} parent=1 // loop_body
      %s23 = ssub.s32 %s18, 1
      %s24 = ssub.s32 %s18, 2
      %s25 = sadd.s32 %s18, 1
      %s26 = ssub.s32 %s18, %s25
      %p27 = scmp.eq.s32.totalorder %s26, 0
      %s29 = sadd.s32 %s28, 1
      %s30 = scalar_select %p27, %s28, %s29
      %p33 = pneg %p27
      %p34 = scmp.eq.s32.totalorder %s18, 1
      %p35 = por %p33, %p34
      %p36 = scmp.ne.s32.totalorder %s28, %s31
      %p37 = scmp.eq.s32.totalorder %s18, 0
      %p38 = por %p36, %p37
      %p39 = scmp.ne.s32.totalorder %s28, %s31
      %p40 = scmp.eq.s32.totalorder %s23, 1
      %p41 = por %p39, %p40
      %p42 = scmp.ne.s32.totalorder %s31, %s32
      %p43 = scmp.eq.s32.totalorder %s23, 0
      %p44 = por %p42, %p43
      %p45 = scmp.ne.s32.totalorder %s31, %s32
      %p46 = scmp.eq.s32.totalorder %s24, 1
      %p47 = por %p45, %p46
      %p49 = scmp.ne.s32.totalorder %s32, %s48
      %p50 = scmp.eq.s32.totalorder %s24, 0
      %p51 = por %p49, %p50
      %s53 = sadd.s32 %s52, 1
      %p56 = scmp.eq.s32.totalorder %s18, 1
      %p57 = scmp.ne.s32.totalorder %s52, %s54
      %p58 = scmp.eq.s32.totalorder %s18, 0
      %p59 = por %p57, %p58
      %p60 = scmp.ne.s32.totalorder %s52, %s54
      %p61 = scmp.eq.s32.totalorder %s23, 1
      %p62 = por %p60, %p61
      %p63 = scmp.ne.s32.totalorder %s54, %s55
      %p64 = scmp.eq.s32.totalorder %s23, 0
      %p65 = por %p63, %p64
      %p66 = scmp.ne.s32.totalorder %s54, %s55
      %p67 = scmp.eq.s32.totalorder %s24, 1
      %p68 = por %p66, %p67
      %p70 = scmp.ne.s32.totalorder %s55, %s69
      %p71 = scmp.eq.s32.totalorder %s24, 0
      %p72 = por %p70, %p71
      %s74 = sadd.s32 %s73, 1
      %p77 = scmp.eq.s32.totalorder %s18, 1
      %p78 = scmp.ne.s32.totalorder %s73, %s75
      %p79 = scmp.eq.s32.totalorder %s18, 0
      %p80 = por %p78, %p79
      %p81 = scmp.ne.s32.totalorder %s73, %s75
      %p82 = scmp.eq.s32.totalorder %s23, 1
      %p83 = por %p81, %p82
      %p84 = scmp.ne.s32.totalorder %s75, %s76
      %p85 = scmp.eq.s32.totalorder %s23, 0
      %p86 = por %p84, %p85
      %p87 = scmp.ne.s32.totalorder %s75, %s76
      %p88 = scmp.eq.s32.totalorder %s24, 1
      %p89 = por %p87, %p88
      %p91 = scmp.ne.s32.totalorder %s76, %s90
      %p92 = scmp.eq.s32.totalorder %s24, 0
      %p93 = por %p91, %p92
      %s95 = sadd.s32 %s94, 1
      %p98 = scmp.eq.s32.totalorder %s18, 1
      %p99 = scmp.ne.s32.totalorder %s94, %s96
      %p100 = scmp.eq.s32.totalorder %s18, 0
      %p101 = por %p99, %p100
      %p102 = scmp.ne.s32.totalorder %s94, %s96
      %p103 = scmp.eq.s32.totalorder %s23, 1
      %p104 = por %p102, %p103
      %p105 = scmp.ne.s32.totalorder %s96, %s97
      %p106 = scmp.eq.s32.totalorder %s23, 0
      %p107 = por %p105, %p106
      %p108 = scmp.ne.s32.totalorder %s96, %s97
      %p109 = scmp.eq.s32.totalorder %s24, 1
      %p110 = por %p108, %p109
      %p112 = scmp.ne.s32.totalorder %s97, %s111
      %p113 = scmp.eq.s32.totalorder %s24, 0
      %p114 = por %p112, %p113
      %s115 = ssub.s32 %s18, %s25
      %p116 = scmp.eq.s32.totalorder %s115, 0
      %s118 = sadd.s32 %s117, 1
      %s119 = scalar_select %p116, %s117, %s118
      %p122 = pneg %p116
      %p123 = scmp.eq.s32.totalorder %s18, 1
      %p124 = por %p122, %p123
      %p125 = scmp.ne.s32.totalorder %s117, %s120
      %p126 = scmp.eq.s32.totalorder %s18, 0
      %p127 = por %p125, %p126
      %p128 = scmp.ne.s32.totalorder %s117, %s120
      %p129 = scmp.eq.s32.totalorder %s23, 1
      %p130 = por %p128, %p129
      %p131 = scmp.ne.s32.totalorder %s120, %s121
      %p132 = scmp.eq.s32.totalorder %s23, 0
      %p133 = por %p131, %p132
      %p134 = scmp.ne.s32.totalorder %s120, %s121
      %p135 = scmp.eq.s32.totalorder %s24, 1
      %p136 = por %p134, %p135
      %p138 = scmp.ne.s32.totalorder %s121, %s137
      %p139 = scmp.eq.s32.totalorder %s24, 0
      %p140 = por %p138, %p139
      %s141 = ssub.s32 %s18, %s25
      %p142 = scmp.eq.s32.totalorder %s141, 0
      %s144 = sadd.s32 %s143, 1
      %s145 = scalar_select %p142, %s143, %s144
      %p148 = pneg %p142
      %p149 = scmp.eq.s32.totalorder %s18, 1
      %p150 = por %p148, %p149
      %p151 = scmp.ne.s32.totalorder %s143, %s146
      %p152 = scmp.eq.s32.totalorder %s18, 0
      %p153 = por %p151, %p152
      %p154 = scmp.ne.s32.totalorder %s143, %s146
      %p155 = scmp.eq.s32.totalorder %s23, 1
      %p156 = por %p154, %p155
      %p157 = scmp.ne.s32.totalorder %s146, %s147
      %p158 = scmp.eq.s32.totalorder %s23, 0
      %p159 = por %p157, %p158
      %p160 = scmp.ne.s32.totalorder %s146, %s147
      %p161 = scmp.eq.s32.totalorder %s24, 1
      %p162 = por %p160, %p161
      %p164 = scmp.ne.s32.totalorder %s147, %s163
      %p165 = scmp.eq.s32.totalorder %s24, 0
      %p166 = por %p164, %p165
      %p167 = scmp.le.s32.totalorder 1, %s18
      %p168 = scmp.lt.s32.totalorder %s18, 3
      %p169 = pnand %p167, %p168
      %p170 = pneg %p169
      // Predicated region
      $region9: #{detector_pallas.1} parent=5 // pred_check
        _
      $region10: #{detector_pallas.1} parent=5 // pred_check_branch
        %172 = sbr.rel (%p169) target = $region12
      $region11: #{detector_pallas.1} parent=5 // pred_region
        %s173 = ssub.s32 %s18, 1
        // Predicated region
        $region13: #{detector_pallas.1} parent=11 // pred_check
          %p174 = pneg %p65
        $region14: #{detector_pallas.1} parent=11 // pred_check_branch
          %176 = sbr.rel (%p174) target = $region16
        $region15: #{detector_pallas.1} parent=11 // pred_region
          _
        $region16: #{detector_pallas.1} parent=11 // pred_fallthru
          _
        // Predicated region
        $region17: #{detector_pallas.1} parent=11 // pred_check
          %p177 = pneg %p86
        $region18: #{detector_pallas.1} parent=11 // pred_check_branch
          %179 = sbr.rel (%p177) target = $region20
        $region19: #{detector_pallas.1} parent=11 // pred_region
          _
        $region20: #{detector_pallas.1} parent=11 // pred_fallthru
          _
        // Predicated region
        $region21: #{detector_pallas.1} parent=11 // pred_check
          %p180 = pneg %p107
        $region22: #{detector_pallas.1} parent=11 // pred_check_branch
          %182 = sbr.rel (%p180) target = $region24
        $region23: #{detector_pallas.1} parent=11 // pred_region
          _
        $region24: #{detector_pallas.1} parent=11 // pred_fallthru
          _
      $region12: #{detector_pallas.1} parent=5 // pred_fallthru
        _
      %p183 = scmp.lt.s32.totalorder %s18, 2
      // Predicated region
      $region25: #{detector_pallas.1} parent=5 // pred_check
        %p184 = pneg %p183
      $region26: #{detector_pallas.1} parent=5 // pred_check_branch
        %186 = sbr.rel (%p184) target = $region28
      $region27: #{detector_pallas.1} parent=5 // pred_region
        // Predicated region
        $region29: #{detector_pallas.1} parent=27 // pred_check
          %p187 = pneg %p38
        $region30: #{detector_pallas.1} parent=27 // pred_check_branch
          %189 = sbr.rel (%p187) target = $region32
        $region31: #{detector_pallas.1} parent=27 // pred_region
          %p190 = scmp.lt.s32.totalorder %s18, 1
          %s191 = scalar_select %p190, %s18, 1
          %s192 = smul.addr %s191, 8
          %s193 = smul.addr %s192, 8
          %s194 = scalar_lea.vmem %s0, %s193
        $region32: #{detector_pallas.1} parent=27 // pred_fallthru
          _
      $region28: #{detector_pallas.1} parent=5 // pred_fallthru
        _
      %p195 = scmp.le.s32.totalorder 1, %s18
      %p196 = scmp.lt.s32.totalorder %s18, 3
      %p197 = pnand %p195, %p196
      %p198 = pneg %p197
      // Predicated region
      $region33: #{detector_pallas.1} parent=5 // pred_check
        _
      $region34: #{detector_pallas.1} parent=5 // pred_check_branch
        %200 = sbr.rel (%p197) target = $region36
      $region35: #{detector_pallas.1} parent=5 // pred_region
        %s201 = ssub.s32 %s18, 1
        %p202 = scmp.lt.s32.totalorder %s23, 1
        %s203 = scalar_select %p202, %s23, 1
        %s204 = smul.addr %s203, 8
        %s205 = smul.addr %s204, 8
        %s206 = scalar_lea.vmem %s0, %s205
        %p207 = pneg %p44
        %p208 = pneg %p41
        %p209 = pneg %p65
        %p210 = pneg %p62
        %p211 = pneg %p86
        %p212 = pneg %p83
        %p213 = pneg %p107
        %p214 = pneg %p104
        %p215 = pneg %p133
        %p216 = pneg %p130
        %s217 = sand.u32 %s120, 1
        %s218 = scalar_lea.sflag [#allocation3], %s217
        %s219 = sand.u32 %s120, 1
        %s220 = smul.addr %s219, 8
        %s221 = scalar_lea.vmem [#allocation2], %s220
        %p222 = pneg %p159
        %p223 = pneg %p156
        %s224 = sand.u32 %s146, 1
        %s225 = scalar_lea.sflag [#allocation5], %s224
        %s226 = sand.u32 %s146, 1
        %s227 = smul.addr %s226, 4
        %s228 = scalar_lea.vmem [#allocation4], %s227
        %p229 = scmp.lt.s32.totalorder %s23, 1
        %s230 = scalar_select %p229, %s23, 1
        %s231 = smul.addr %s230, 8
        %s232 = smul.addr %s231, 8
        %s233 = scalar_lea.vmem %s0, %s232
        %v234 = vld [vmem:[%s233] sm:$0xff]
        %v235 = vld [vmem:[%s233 + $0x8] sm:$0xff]
        %v236 = vld [vmem:[%s233 + $0x10] sm:$0xff]
        %v237 = vld [vmem:[%s233 + $0x18] sm:$0xff]
        %v238 = vld [vmem:[%s233 + $0x20] sm:$0xff]
        %v239 = vld [vmem:[%s233 + $0x28] sm:$0xff]
        %v240 = vld [vmem:[%s233 + $0x30] sm:$0xff]
        %v241 = vld [vmem:[%s233 + $0x38] sm:$0xff]
        %v242 = vld [vmem:[%s1] sm:$0xff]
        %v243 = vld [vmem:[%s1 + $0x8] sm:$0xff]
        %v244 = vld [vmem:[%s2] sm:$0xff]
        %v245 = vld [vmem:[%s2 + $0x8] sm:$0xff]
        %247 = vset.pattern.permute.xlu0 0
        %248 = vperm.xlu0 %247, %v244
        %v249 = vpop.permute.xlu0 %248
        %252 = vset.pattern.permute.xlu0 0
        %253 = vperm.xlu0 %252, %v245
        %v254 = vpop.permute.xlu0 %253
        %vm256 = vcmask 523264
        %v258 = vsel %vm256, %v242, 0
        %v261 = vsel %vm256, %v243, 0
        %263 = vmatprep.subr.mxu0 0.0
        %264 = vmatpush1.msra.mxu0 %v234
        %265 = vmatprep.subr.mxu0 0.0
        %266 = vmatpush1.msra.mxu0 %v235
        %267 = vmatprep.subr.mxu0 0.0
        %268 = vmatpush1.msra.mxu0 %v236
        %269 = vmatprep.subr.mxu0 0.0
        %270 = vmatpush1.msra.mxu0 %v237
        %271 = vmatprep.subr.mxu0 0.0
        %272 = vmatpush1.msra.mxu0 %v238
        %273 = vmatprep.subr.mxu0 0.0
        %274 = vmatpush1.msra.mxu0 %v239
        %275 = vmatprep.subr.mxu0 0.0
        %276 = vmatpush1.msra.mxu0 %v240
        %277 = vmatprep.subr.mxu0 0.0
        %278 = vmatpush1.msra.mxu0 %v241
        %279 = vmatprep.subr.mxu0 0.0
        %280 = vmatpush1.msra.mxu0 0.0
        %281 = vmatprep.subr.mxu0 0.0
        %282 = vmatpush1.msra.mxu0 0.0
        %283 = vmatprep.subr.mxu0 0.0
        %284 = vmatpush1.msra.mxu0 0.0
        %285 = vmatprep.subr.mxu0 0.0
        %286 = vmatpush1.msra.mxu0 0.0
        %287 = vmatprep.subr.mxu0 0.0
        %288 = vmatpush1.msra.mxu0 0.0
        %289 = vmatprep.subr.mxu0 0.0
        %290 = vmatpush1.msra.mxu0 0.0
        %291 = vmatprep.subr.mxu0 0.0
        %292 = vmatpush1.msra.mxu0 0.0
        %293 = vmatprep.subr.mxu0 0.0
        %294 = vmatpush1.msra.mxu0 0.0
        %295 = vmatprep.subr.mxu0 0.0
        %296 = vmatpush1.msra.mxu0 0.0
        %297 = vmatprep.subr.mxu0 0.0
        %298 = vmatpush1.msra.mxu0 0.0
        %299 = vmatprep.subr.mxu0 0.0
        %300 = vmatpush1.msra.mxu0 0.0
        %301 = vmatprep.subr.mxu0 0.0
        %302 = vmatpush1.msra.mxu0 0.0
        %303 = vmatprep.subr.mxu0 0.0
        %304 = vmatpush1.msra.mxu0 0.0
        %305 = vmatprep.subr.mxu0 0.0
        %306 = vmatpush1.msra.mxu0 0.0
        %307 = vmatprep.subr.mxu0 0.0
        %308 = vmatpush1.msra.mxu0 0.0
        %309 = vmatprep.subr.mxu0 0.0
        %310 = vmatpush1.msra.mxu0 0.0
        %311 = vmatprep.subr.mxu0 0.0
        %312 = vmatpush1.msra.mxu0 0.0
        %313 = vmatprep.subr.mxu0 0.0
        %314 = vmatpush1.msra.mxu0 0.0
        %315 = vmatprep.subr.mxu0 0.0
        %316 = vmatpush1.msra.mxu0 0.0
        %317 = vmatprep.subr.mxu0 0.0
        %318 = vmatpush1.msra.mxu0 0.0
        %319 = vmatprep.subr.mxu0 0.0
        %320 = vmatpush1.msra.mxu0 0.0
        %321 = vmatprep.subr.mxu0 0.0
        %322 = vmatpush1.msra.mxu0 0.0
        %323 = vmatprep.subr.mxu0 0.0
        %324 = vmatpush1.msra.mxu0 0.0
        %325 = vmatprep.subr.mxu0 0.0
        %326 = vmatpush1.msra.mxu0 0.0
        %327 = vmatprep.mubr.f32.mxu0 0.0
        %328 = vmatmul.mubr.f32.gmra.mrb[0].mxu0 %v258
        %v329 = vpop.f32.mrb[0].mxu0
        %v330 = vadd.f32 %v249, %v329
        %v331 = vpop.f32.mrb[0].mxu0
        %332 = vmatprep.mubr.f32.mxu0 0.0
        %333 = vmatmul.mubr.f32.gmra.mrb[0].mxu0 %v261
        %v334 = vpop.f32.mrb[0].mxu0
        %v335 = vadd.f32 %v254, %v334
        %v336 = vpop.f32.mrb[0].mxu0
        %337 = vdwg.mxu0
        %v338 = vlaneseq
        %v339 = vshrl.u32 %v338, 7
        %vm340 = vcmp.lt.s32.totalorder %v339, 2
        %v341 = vsel %vm340, -1.0, 1.0
        %v342 = vmax.f32 %v335, 0.0
        %v343 = vmul.f32 %v342, %v341
        %v344 = vld [vmem:[%s3] sm:$0xf]
        %v345 = vadd.f32 %v343, %v344
        %v346 = vxor.u32 %v335, 2147483648
        %v347 = vmul.f32 %v346, 1.442695
        %v348 = vpow.pop %v347
        %v349 = vadd.f32 %v348, 1.0
        %v350 = vrcp.pop %v349
        %v351 = vmul.f32 1.0, %v350
        %v352 = vmul.f32 %v351, 2.0
        %v353 = vsub.f32 %v352, 1.0
        %v354 = vxor.u32 %v353, 2147483648
        %v355 = vmul.f32 %v354, 1.442695
        %v356 = vpow.pop %v355
        %v357 = vadd.f32 %v356, 1.0
        %v358 = vrcp.pop %v357
        %v359 = vmul.f32 1.0, %v358
        %v360 = vsub.f32 2.0, %v359
        %v361 = vmul.f32 %v360, 0.6
        %v362 = vadd.f32 %v361, 1e-14
        %v363 = vsub.f32 0.0, %v330
        %v364 = vmax.f32 %v363, 0.0
        %vm365 = vcmp.ne.f32.partialorder %v363, %v363
        %v366 = vadd.f32 %v363, 0.0
        %v367 = vand.u32 2147483647, %v363
        %v368 = vsub.f32 0.0, %v367
        %v369 = vmul.f32 %v368, 1.442695
        %v370 = vpow.pop %v369
        %v371 = vadd.f32 %v370, 1.0
        %v372 = vlog2.pop %v371
        %v373 = vmul.f32 %v372, 0.6931472
        %v374 = vmul.f32 -0.5, %v370
        %v375 = vadd.f32 %v374, 1.0
        %v376 = vmul.f32 %v375, %v370
        %v377 = vand.u32 2147483647, %v370
        %vm378 = vcmp.lt.f32.partialorder %v377, 0.0004427343
        %v379 = vsel %vm378, %v376, %v373
        %v380 = vadd.f32 %v364, %v379
        %v381 = vsel %vm365, %v366, %v380
        %v382 = vsub.f32 0.0, %v381
        %v383 = vlaneseq
        %v384 = vshrl.u32 %v383, 7
        %v385 = vsub.s32 4, %v384
        %v386 = vrot.slane %v362, %v385
        %v387 = vmul.f32 %v386, %v382
        %v388 = vmul.f32 %v387, 1.442695
        %v389 = vpow.pop %v388
        %v390 = vlaneseq
        %v391 = vand.u32 %v390, 127
        %vm392 = vcmp.eq.s32.totalorder %v391, 0
        %vm393 = vcmask 1048064
        %394 = vrot.lane.b32.xlu0 %v389, 64
        %v395 = vpop.permute.xlu0 %394
        %v396 = vsel %vm393, %v395, %v389
        %397 = vrot.lane.b32.xlu0 %v396, 64
        %v398 = vpop.permute.xlu0 %397
        %v399 = vsel %vm393, %v398, %v389
        %v400 = vsel %vm392, 1, 0
        %vm401 = vcmp.eq.s32.totalorder %v400, 1
        %403 = vrot.lane.b32.xlu0 %v399, 65
        %v404 = vpop.permute.xlu0 %403
        %v406 = vsel %vm401, -inf, %v404
        %vm407 = vcmp.eq.s32.totalorder %v391, 63
        %v408 = vsel %vm407, 1, 0
        %vm409 = vcmp.eq.s32.totalorder %v408, 1
        %410 = vrot.lane.b32.xlu0 %v399, 127
        %v411 = vpop.permute.xlu0 %410
        %v413 = vsel %vm409, -inf, %v411
        %v414 = vmax.f32 %v406, %v389
        %v415 = vmax.f32 %v414, %v413
        %vm416 = vcmp.eq.s32.totalorder %v339, 0
        %v417 = vrot.slane %v415, 7
        %v418 = vsel %vm416, 1, 0
        %vm419 = vcmp.eq.s32.totalorder %v418, 1
        %v420 = vsel %vm419, -inf, %v417
        %vm421 = vcmp.eq.s32.totalorder %v339, 7
        %v422 = vrot.slane %v415, 1
        %v423 = vsel %vm421, 1, 0
        %vm424 = vcmp.eq.s32.totalorder %v423, 1
        %v425 = vsel %vm424, -inf, %v422
        %v426 = vmax.f32 %v420, %v415
        %v427 = vmax.f32 %v426, %v425
        %vm428 = vcmp.eq.f32.partialorder %v427, %v389
        %v429 = vsel %vm428, %v389, 0.0
        %430 = vst.msk [vmem:[%s221] sm:$0xff] %vm256, %v429
        %vm431 = vcmask 519168
        %432 = vst.msk [vmem:[%s228] sm:$0xf] %vm431, %v345
        %s433 = sand.u32 %s120, 1
        %s434 = scalar_lea.sflag [#allocation3], %s433
        %s435 = sand.u32 %s120, 1
        %s436 = smul.addr %s435, 8
        %s437 = scalar_lea.vmem [#allocation2], %s436
        %s438 = sand.u32 %s146, 1
        %s439 = scalar_lea.sflag [#allocation5], %s438
        %s440 = sand.u32 %s146, 1
        %s441 = smul.addr %s440, 4
        %s442 = scalar_lea.vmem [#allocation4], %s441
        // Predicated region
        $region37: #{detector_pallas.1} parent=35 // pred_check
          %p443 = pneg %p130
        $region38: #{detector_pallas.1} parent=35 // pred_check_branch
          %445 = sbr.rel (%p443) target = $region40
        $region39: #{detector_pallas.1} parent=35 // pred_region
          %s447 = ssub.s32 128, 128
          %448 = vsyncadd %s434, %s447
          %s449 = smul.addr %s23, 128
          %s450 = scalar_lea.hbm %s4, %s449
          %s452 = sshll.u32 %s437, 4
          %s453 = int_to_ptr.vmem [resolvable:$true] %s452
          %455 = dma.vmem_to_hbm [thread:$0]  %s453, 128, %s450, %s434
        $region40: #{detector_pallas.1} parent=35 // pred_fallthru
          _
        // Predicated region
        $region41: #{detector_pallas.1} parent=35 // pred_check
          %p456 = pneg %p156
        $region42: #{detector_pallas.1} parent=35 // pred_check_branch
          %458 = sbr.rel (%p456) target = $region44
        $region43: #{detector_pallas.1} parent=35 // pred_region
          %s460 = ssub.s32 64, 64
          %461 = vsyncadd %s439, %s460
          %s462 = smul.addr %s23, 64
          %s463 = scalar_lea.hbm %s5, %s462
          %s465 = sshll.u32 %s442, 4
          %s466 = int_to_ptr.vmem [resolvable:$true] %s465
          %468 = dma.vmem_to_hbm [thread:$0]  %s466, 64, %s463, %s439
        $region44: #{detector_pallas.1} parent=35 // pred_fallthru
          _
      $region36: #{detector_pallas.1} parent=5 // pred_fallthru
        _
      %p469 = scmp.le.s32.totalorder 2, %s18
      // Predicated region
      $region45: #{detector_pallas.1} parent=5 // pred_check
        %p470 = pneg %p469
      $region46: #{detector_pallas.1} parent=5 // pred_check_branch
        %472 = sbr.rel (%p470) target = $region48
      $region47: #{detector_pallas.1} parent=5 // pred_region
        %s473 = ssub.s32 %s18, 2
        // Predicated region
        $region49: #{detector_pallas.1} parent=47 // pred_check
          %p474 = pneg %p136
        $region50: #{detector_pallas.1} parent=47 // pred_check_branch
          %476 = sbr.rel (%p474) target = $region52
        $region51: #{detector_pallas.1} parent=47 // pred_region
          %s477 = sand.u32 %s121, 1
          %s478 = scalar_lea.sflag [#allocation3], %s477
          %s479 = sand.u32 %s121, 1
          %s480 = smul.addr %s479, 8
          %s481 = scalar_lea.vmem [#allocation2], %s480
          %482 = dma.done %s478, 128
        $region52: #{detector_pallas.1} parent=47 // pred_fallthru
          _
        // Predicated region
        $region53: #{detector_pallas.1} parent=47 // pred_check
          %p483 = pneg %p162
        $region54: #{detector_pallas.1} parent=47 // pred_check_branch
          %485 = sbr.rel (%p483) target = $region56
        $region55: #{detector_pallas.1} parent=47 // pred_region
          %s486 = sand.u32 %s147, 1
          %s487 = scalar_lea.sflag [#allocation5], %s486
          %s488 = sand.u32 %s147, 1
          %s489 = smul.addr %s488, 4
          %s490 = scalar_lea.vmem [#allocation4], %s489
          %491 = dma.done %s487, 64
        $region56: #{detector_pallas.1} parent=47 // pred_fallthru
          _
      $region48: #{detector_pallas.1} parent=5 // pred_fallthru
        _
    $region6: #{detector_pallas.1} parent=1 // loop_footer
      %s22 = sadd.s32 1, %s18
    $region7: #{detector_pallas.1} parent=1 // loop_footer_branch
      %17 = sbr.rel target = $region3
    $region8: #{detector_pallas.1} parent=1 // loop_exit
      _
    %492 = vsyncpa [#allocation3], 1
    %s493 = scalar_lea.sflag [#allocation3], 1
    %494 = vsyncpa %s493, 1
    %495 = vsyncpa [#allocation5], 1
    %s496 = scalar_lea.sflag [#allocation5], 1
    %497 = vsyncpa %s496, 1

</llo_original>
